<compile_context>
chip_gen: v6e
topology: v6e:2x2x1
jax: 0.10.0
libtpu: 0.0.40
codegen_flags: <defaults>
</compile_context>

<pallas_src>
import math
import functools

import numpy as np
import jax
import jax.numpy as jnp
from jax.experimental import pallas as pl
from jax.experimental.pallas import tpu as pltpu


# TODO(synk): re-derive per-generation (v7x has 64 MiB physical VMEM, v5e/v6e 128 MiB);
#             48 MiB is safe on all three.
_VMEM_LIMIT = 48 * 1024 * 1024


# -----------------------------------------------------------------------------
# Tiled bf16 matmul kernel (MXU) with f32 accumulation, fused bias/activation
# -----------------------------------------------------------------------------

def _matmul_kernel(a_ref, b_ref, bias_ref, o_ref, acc_ref, *, activation):
    @pl.when(pl.program_id(2) == 0)
    def _init():
        acc_ref[...] = jnp.zeros_like(acc_ref)

    a = a_ref[...].astype(jnp.bfloat16)          # in-kernel cast: no wrapper astype pass
    b = b_ref[...].astype(jnp.bfloat16)
    acc_ref[...] += jnp.dot(a, b, preferred_element_type=jnp.float32)

    @pl.when(pl.program_id(2) == pl.num_programs(2) - 1)
    def _finalize():
        r = acc_ref[...] + bias_ref[...]
        if activation == "swish":
            r = r * jax.nn.sigmoid(r)
        elif activation == "tanh":
            r = jnp.tanh(r)
        o_ref[...] = r.astype(o_ref.dtype)


def pallas_matmul(a, b, bias=None, *, activation=None, out_dtype=jnp.float32):
    """a: (M, K), b: (K, N), bias: (N,) or None -> (M, N) out_dtype.

    Operands are cast to bf16 inside the kernel; accumulation stays in f32 VMEM scratch.
    M/N tails rely on Pallas' implicit output masking; K is zero-padded only when tiled.
    """
    M, K = a.shape
    K2, N = b.shape
    assert K == K2
    if bias is None:
        bias = jnp.zeros((N,), jnp.float32)
    bias2 = bias.reshape(1, N).astype(jnp.float32)

    TM = min(256, ((M + 7) // 8) * 8)
    if N <= 256:
        TN = N
    elif N % 256 == 0:
        TN = 256
    elif N % 128 == 0:
        TN = 128
    else:
        TN = 256
    if K <= 1024:
        TK = K
    else:
        TK = 512
        Kp = ((K + TK - 1) // TK) * TK
        if Kp != K:        # reduction axis: zero-pad so garbage never accumulates
            a = jnp.pad(a, ((0, 0), (0, Kp - K)))
            b = jnp.pad(b, ((0, Kp - K), (0, 0)))
            K = Kp

    grid = (pl.cdiv(M, TM), pl.cdiv(N, TN), pl.cdiv(K, TK))
    return pl.pallas_call(
        functools.partial(_matmul_kernel, activation=activation),
        grid=grid,
        in_specs=[
            pl.BlockSpec((TM, TK), lambda i, j, k: (i, k)),
            pl.BlockSpec((TK, TN), lambda i, j, k: (k, j)),
            pl.BlockSpec((1, TN), lambda i, j, k: (0, j)),
        ],
        out_specs=pl.BlockSpec((TM, TN), lambda i, j, k: (i, j)),
        out_shape=jax.ShapeDtypeStruct((M, N), out_dtype),
        scratch_shapes=[pltpu.VMEM((TM, TN), jnp.float32)],
        compiler_params=pltpu.CompilerParams(
            dimension_semantics=("parallel", "parallel", "arbitrary"),
            vmem_limit_bytes=_VMEM_LIMIT),
    )(a, b, bias2)


# -----------------------------------------------------------------------------
# Channel-last stride-1 Conv1d kernel: in-VMEM accumulation over kernel taps
# -----------------------------------------------------------------------------

def _conv1d_kernel(x_ref, w_ref, b_ref, o_ref, *, K, dil):
    # x: (1, Tp, Cin), w: (K, Cin, CN), b: (1, CN), o: (1, T_out, CN)
    T_out = o_ref.shape[1]
    x = x_ref[0].astype(jnp.bfloat16)
    w = w_ref[...].astype(jnp.bfloat16)
    acc = jnp.zeros((T_out, o_ref.shape[2]), jnp.float32)
    for k in range(K):                       # K <= 11: static sublane-dim slices
        xk = x[k * dil:k * dil + T_out, :]
        acc = acc + jnp.dot(xk, w[k], preferred_element_type=jnp.float32)
    o_ref[0] = (acc + b_ref[...]).astype(o_ref.dtype)


def _conv1d_core(xp, wt, b, dilation=1, out_dtype=jnp.float32):
    """xp: (B, Tp, Cin) pre-padded; wt: (K, Cin, Cout'); b: (Cout',)."""
    B, Tp, Cin = xp.shape
    K, _, Cout = wt.shape
    T_out = Tp - dilation * (K - 1)
    CN = Cout if Cout <= 256 else 256
    # TODO(synk): time-tiling with a (K-1)*dil halo (manual DMA / Element offsets) is
    #             needed for very long T on v7x; whole-T blocks are used here.
    return pl.pallas_call(
        functools.partial(_conv1d_kernel, K=K, dil=dilation),
        grid=(B, pl.cdiv(Cout, CN)),
        in_specs=[
            pl.BlockSpec((1, Tp, Cin), lambda bi, ci: (bi, 0, 0)),
            pl.BlockSpec((K, Cin, CN), lambda bi, ci: (0, 0, ci)),
            pl.BlockSpec((1, CN), lambda bi, ci: (0, ci)),
        ],
        out_specs=pl.BlockSpec((1, T_out, CN), lambda bi, ci: (bi, 0, ci)),
        out_shape=jax.ShapeDtypeStruct((B, T_out, Cout), out_dtype),
        compiler_params=pltpu.CompilerParams(
            dimension_semantics=("parallel", "parallel"),
            vmem_limit_bytes=_VMEM_LIMIT),
    )(xp, wt, b.reshape(1, Cout).astype(jnp.float32))


def conv1d_btc(x, w, b, dilation=1, padding=0, out_dtype=jnp.float32):
    """x: (B, T, Cin) channel-last, w: (Cout, Cin, K) torch layout, b: (Cout,)."""
    xp = jnp.pad(x, ((0, 0), (padding, padding), (0, 0)))
    wt = jnp.transpose(w, (2, 1, 0))
    return _conv1d_core(xp, wt, b, dilation, out_dtype)


def conv1d_btc_strided(x, w, b, stride, padding):
    """Strided conv, only used for the small (n_fft+2)-channel noise conv (num_ups>1)."""
    B, T, Cin = x.shape
    Cout, _, K = w.shape
    xp = jnp.pad(x, ((0, 0), (padding, padding), (0, 0)))
    Tp = xp.shape[1]
    T_out = (Tp - K) // stride + 1
    cols = [xp[:, k:k + stride * (T_out - 1) + 1:stride, :] for k in range(K)]
    patches = jnp.concatenate(cols, axis=-1).reshape(B * T_out, K * Cin)
    wf = jnp.transpose(w, (2, 1, 0)).reshape(K * Cin, Cout)
    out = pallas_matmul(patches, wf, b)
    return out.reshape(B, T_out, Cout)


def conv_transpose1d_btc(x, w, b, stride, padding):
    """Polyphase ConvTranspose1d in channel-last, no zero-stuffing, no HBM shift-copies.

    x: (B, T, Cin); w: (Cin, Cout, K) torch layout; output (B, L_out, Cout).
    """
    B, T, Cin = x.shape
    _, Cout, K = w.shape
    u, p = stride, padding
    if u == 1:
        w2 = jnp.transpose(w[:, :, ::-1], (1, 0, 2))
        return conv1d_btc(x, w2, b, padding=K - 1 - p)

    L_out = (T - 1) * u - 2 * p + K
    Tq = -(-L_out // u)

    # y[q*u + r] = sum_s x[q + s] @ w[:, :, r + p - s*u]    (static tap bookkeeping)
    smin = min(int(math.ceil((r + p - K + 1) / u)) for r in range(u))
    smax = max((r + p) // u for r in range(u))
    S = smax - smin + 1

    blocks = []
    for sft in range(smin, smax + 1):
        row = []
        for r in range(u):
            j = r + p - sft * u
            row.append(w[:, :, j] if 0 <= j < K else jnp.zeros((Cin, Cout), w.dtype))
        blocks.append(jnp.concatenate(row, axis=1))            # (Cin, u*Cout)
    w_poly = jnp.stack(blocks, axis=0)                          # (S, Cin, u*Cout)

    start = smin
    end = Tq - 1 + smax
    pad_l = max(0, -start)
    pad_r = max(0, end - (T - 1))
    xp = jnp.pad(x, ((0, 0), (pad_l, pad_r), (0, 0)))
    x_work = xp[:, start + pad_l:start + pad_l + Tq + S - 1, :]

    y = _conv1d_core(x_work, w_poly, jnp.tile(b, u), dilation=1)   # (B, Tq, u*Cout)
    y = y.reshape(B, Tq * u, Cout)                                 # phase interleave = reshape
    return y[:, :L_out, :]


# -----------------------------------------------------------------------------
# Elementwise Pallas kernels: snake, fused AdaIN+snake, LayerNorm, depthwise conv
# -----------------------------------------------------------------------------

def _snake_kernel(x_ref, a_ref, o_ref):
    x = x_ref[...]
    a = a_ref[...]
    inv_a = 1.0 / a                         # small (1,1,CT) block, broadcast multiply
    s = jnp.sin(a * x)
    o_ref[...] = (x + s * s * inv_a).astype(o_ref.dtype)


def snake_btc(x, alpha, out_dtype=jnp.float32):
    """x + 1/a * sin(a*x)^2 in (B, T, C) layout (channels on lanes)."""
    B, T, C = x.shape
    a = alpha.reshape(1, 1, -1).astype(jnp.float32)
    TT = T if T <= 512 else 512
    CT = C if C <= 512 else 512
    grid = (B, pl.cdiv(T, TT), pl.cdiv(C, CT))
    return pl.pallas_call(
        _snake_kernel,
        grid=grid,
        in_specs=[
            pl.BlockSpec((1, TT, CT), lambda b, t, c: (b, t, c)),
            pl.BlockSpec((1, 1, CT), lambda b, t, c: (0, 0, c)),
        ],
        out_specs=pl.BlockSpec((1, TT, CT), lambda b, t, c: (b, t, c)),
        out_shape=jax.ShapeDtypeStruct((B, T, C), out_dtype),
        compiler_params=pltpu.CompilerParams(
            dimension_semantics=("parallel", "parallel", "parallel")),
    )(x.astype(jnp.float32), a)


def _adain_snake_kernel(x_ref, g_ref, bt_ref, a_ref, o_ref):
    x = x_ref[0].astype(jnp.float32)                           # (T, CT)
    mean = jnp.mean(x, axis=0, keepdims=True)                  # instance norm over time
    var = jnp.mean(jnp.square(x - mean), axis=0, keepdims=True)
    xn = (x - mean) * jax.lax.rsqrt(var + 1e-5)
    y = (1.0 + g_ref[0]) * xn + bt_ref[0]
    a = a_ref[0]
    inv_a = 1.0 / a
    s = jnp.sin(a * y)
    o_ref[0] = (y + s * s * inv_a).astype(o_ref.dtype)


def adain_snake_btc(x, h, alpha, out_dtype=jnp.bfloat16):
    """Fused InstanceNorm1d modulate (AdaIN) + snake, channel-last.

    x: (B, T, C); h: (B, T, 2C) = [gamma | beta]; alpha: (1, C, 1) torch layout.
    Emits bf16 (consumer is always a bf16-MXU conv).
    """
    B, T, C = x.shape
    a = alpha.reshape(1, 1, -1).astype(jnp.float32)
    CT = 128 if (C % 128 == 0 and C > 128) else C
    nC = C // CT
    # TODO(synk): the instance-norm reduction needs the full T axis per block; for very
    #             long T this should become a two-pass (stats kernel + tiled modulate).
    return pl.pallas_call(
        _adain_snake_kernel,
        grid=(B, nC),
        in_specs=[
            pl.BlockSpec((1, T, CT), lambda b, c: (b, 0, c)),
            pl.BlockSpec((1, T, CT), lambda b, c: (b, 0, c)),           # gamma half of h
            pl.BlockSpec((1, T, CT), lambda b, c: (b, 0, c + nC)),      # beta half of h
            pl.BlockSpec((1, 1, CT), lambda b, c: (0, 0, c)),
        ],
        out_specs=pl.BlockSpec((1, T, CT), lambda b, c: (b, 0, c)),
        out_shape=jax.ShapeDtypeStruct((B, T, C), out_dtype),
        compiler_params=pltpu.CompilerParams(
            dimension_semantics=("parallel", "parallel"),
            vmem_limit_bytes=_VMEM_LIMIT),
    )(x, h, h, a)


def _ln_kernel(x_ref, g_ref, b_ref, o_ref, *, eps):
    x = x_ref[...].astype(jnp.float32)
    mean = jnp.mean(x, axis=-1, keepdims=True)
    var = jnp.mean(jnp.square(x - mean), axis=-1, keepdims=True)
    xn = (x - mean) * jax.lax.rsqrt(var + eps)
    o_ref[...] = (xn * g_ref[...] + b_ref[...]).astype(o_ref.dtype)


def layer_norm_pallas(x, g, b, out_dtype=jnp.float32, eps=1e-5):
    """LayerNorm over the last dim; emits bf16 directly for matmul consumers."""
    B, T, D = x.shape
    TT = T if T <= 256 else 256
    return pl.pallas_call(
        functools.partial(_ln_kernel, eps=eps),
        grid=(B, pl.cdiv(T, TT)),
        in_specs=[
            pl.BlockSpec((1, TT, D), lambda bb, t: (bb, t, 0)),
            pl.BlockSpec((1, 1, D), lambda bb, t: (0, 0, 0)),
            pl.BlockSpec((1, 1, D), lambda bb, t: (0, 0, 0)),
        ],
        out_specs=pl.BlockSpec((1, TT, D), lambda bb, t: (bb, t, 0)),
        out_shape=jax.ShapeDtypeStruct((B, T, D), out_dtype),
        compiler_params=pltpu.CompilerParams(
            dimension_semantics=("parallel", "parallel")),
    )(x, g.reshape(1, 1, D).astype(jnp.float32), b.reshape(1, 1, D).astype(jnp.float32))


def _dwconv_kernel(x_ref, w_ref, b_ref, o_ref, acc_ref, *, K, bn_scale):
    # time on sublanes, channels dense on lanes.  x: (1, Tp, CT), w: (K, CT), b: (1, CT)
    T_out = o_ref.shape[1]
    x = x_ref[0]
    w = w_ref[...]
    acc_ref[...] = jnp.zeros_like(acc_ref)
    for k in range(K):                       # static sublane-dim slices into a VMEM scratch
        acc_ref[...] += x[k:k + T_out, :] * w[k:k + 1, :]
    h = (acc_ref[...] + b_ref[...]) * bn_scale    # BatchNorm1d (eval, fresh stats) folded in
    o_ref[0] = (h * jax.nn.sigmoid(h)).astype(o_ref.dtype)   # swish fused in


def depthwise_conv_swish(x, w, b, pad, bn_scale, out_dtype=jnp.bfloat16):
    """Depthwise conv over time in (B, T, C) layout, fused BN-scale + swish."""
    B, T, C = x.shape
    K = w.shape[1]
    xp = jnp.pad(x, ((0, 0), (pad[0], pad[1]), (0, 0)))
    Tp = xp.shape[1]
    T_out = Tp - K + 1
    CT = 128 if (C % 128 == 0 and C > 128) else C
    return pl.pallas_call(
        functools.partial(_dwconv_kernel, K=K, bn_scale=bn_scale),
        grid=(B, pl.cdiv(C, CT)),
        in_specs=[
            pl.BlockSpec((1, Tp, CT), lambda bi, ci: (bi, 0, ci)),
            pl.BlockSpec((K, CT), lambda bi, ci: (0, ci)),
            pl.BlockSpec((1, CT), lambda bi, ci: (0, ci)),
        ],
        out_specs=pl.BlockSpec((1, T_out, CT), lambda bi, ci: (bi, 0, ci)),
        out_shape=jax.ShapeDtypeStruct((B, T_out, C), out_dtype),
        scratch_shapes=[pltpu.VMEM((T_out, CT), jnp.float32)],
        compiler_params=pltpu.CompilerParams(
            dimension_semantics=("parallel", "parallel"),
            vmem_limit_bytes=_VMEM_LIMIT),
    )(xp.astype(jnp.float32), jnp.transpose(w, (1, 0)).astype(jnp.float32),
      b.reshape(1, C).astype(jnp.float32))


# -----------------------------------------------------------------------------
# Fused attention kernel (QK^T + rel-pos bias + softmax + AV), two heads per step
# -----------------------------------------------------------------------------

def _attn_kernel(q_ref, k_ref, v_ref, pos_ref, o_ref, *, scale, pair):
    q_all = q_ref[0]                                           # (pair, TQ, Dh) bf16
    k_all = k_ref[0]
    v_all = v_ref[0]
    pos_all = pos_ref[0]
    outs = []
    for h in range(pair):
        q = q_all[h]
        k = k_all[h]
        s = jax.lax.dot_general(q, k, (((1,), (1,)), ((), ())),
                                preferred_element_type=jnp.float32)
        s = (s + pos_all[h].astype(jnp.float32)) * scale
        m = jnp.max(s, axis=-1, keepdims=True)
        e = jnp.exp(s - m)
        p = e * pl.reciprocal(jnp.sum(e, axis=-1, keepdims=True), approx=False)
        outs.append(jnp.dot(p.astype(v_all.dtype), v_all[h],
                            preferred_element_type=jnp.float32))
    o_ref[0] = jnp.concatenate(outs, axis=-1).astype(o_ref.dtype)   # lane-dense write


def fused_attention(q, k, v, pos, scale):
    """q/k/v: (G, pair, T, Dh) bf16, pos: (G, pair, T, T) bf16 -> (G, T, pair*Dh) bf16."""
    G, pair, T, Dh = q.shape
    TQ = T if T <= 128 else 128
    return pl.pallas_call(
        functools.partial(_attn_kernel, scale=scale, pair=pair),
        grid=(G, pl.cdiv(T, TQ)),
        in_specs=[
            pl.BlockSpec((1, pair, TQ, Dh), lambda g, t: (g, 0, t, 0)),
            pl.BlockSpec((1, pair, T, Dh), lambda g, t: (g, 0, 0, 0)),
            pl.BlockSpec((1, pair, T, Dh), lambda g, t: (g, 0, 0, 0)),
            pl.BlockSpec((1, pair, TQ, T), lambda g, t: (g, 0, t, 0)),
        ],
        out_specs=pl.BlockSpec((1, TQ, pair * Dh), lambda g, t: (g, t, 0)),
        out_shape=jax.ShapeDtypeStruct((G, T, pair * Dh), jnp.bfloat16),
        compiler_params=pltpu.CompilerParams(
            dimension_semantics=("parallel", "parallel"),
            vmem_limit_bytes=_VMEM_LIMIT),
    )(q, k, v, pos)


# -----------------------------------------------------------------------------
# Plain-JAX helpers (interpolation, STFT/ISTFT)
# -----------------------------------------------------------------------------

def interp_linear(x, out_size):
    """torch F.interpolate(mode='linear', align_corners=False). x: (B, C, T)."""
    B, C, T_in = x.shape
    if T_in == out_size:
        return x
    scale = T_in / out_size
    src = (jnp.arange(out_size, dtype=jnp.float32) + 0.5) * scale - 0.5
    src = jnp.clip(src, 0.0, T_in - 1)
    i0 = jnp.floor(src).astype(jnp.int32)
    i1 = jnp.minimum(i0 + 1, T_in - 1)
    w = src - i0.astype(jnp.float32)
    return x[:, :, i0] * (1.0 - w) + x[:, :, i1] * w


def nearest_idx(out_size, in_size):
    """torch F.interpolate(mode='nearest') index map (exact integer arithmetic)."""
    return (jnp.arange(out_size, dtype=jnp.int32) * in_size) // out_size


def hann_window(n):
    return 0.5 - 0.5 * jnp.cos(2.0 * jnp.pi * jnp.arange(n, dtype=jnp.float32) / n)


def stft(x, n_fft, hop, window):
    """torch.stft semantics (center=True, reflect pad, onesided). Returns (B, F, bins)."""
    pad = n_fft // 2
    xp = jnp.pad(x, ((0, 0), (pad, pad)), mode="reflect")
    n_frames = 1 + (xp.shape[1] - n_fft) // hop
    idx = jnp.arange(n_frames)[:, None] * hop + jnp.arange(n_fft)[None, :]
    frames = xp[:, idx] * window[None, None, :]
    # TODO(synk): FFT has no Pallas primitive; done with jnp.fft in XLA glue.
    return jnp.fft.rfft(frames, axis=-1)


def istft(spec, n_fft, hop, window):
    """spec: (B, bins, frames) complex."""
    B = spec.shape[0]
    frames = jnp.fft.irfft(jnp.swapaxes(spec, 1, 2), n=n_fft, axis=-1)
    frames = frames * window[None, None, :]
    F_ = frames.shape[1]
    out_len = n_fft + hop * (F_ - 1)
    idx = (jnp.arange(F_)[:, None] * hop + jnp.arange(n_fft)[None, :]).reshape(-1)
    sig = jnp.zeros((B, out_len), jnp.float32).at[:, idx].add(frames.reshape(B, -1))
    env = jnp.zeros((out_len,), jnp.float32).at[idx].add(jnp.tile(window ** 2, F_))
    pad = n_fft // 2
    sig = sig[:, pad:out_len - pad]
    env = env[pad:out_len - pad]
    return sig / jnp.where(env > 1e-11, env, 1.0)


# -----------------------------------------------------------------------------
# Model sub-modules (channel-last)
# -----------------------------------------------------------------------------

def adain_fc_small(s0, fc):
    """AdaIN fc evaluated at STYLE resolution.  s0: (B, Ts, SD) -> (B, Ts, 2C)."""
    B, Ts, SD = s0.shape
    h = pallas_matmul(s0.reshape(B * Ts, SD), fc["w"], fc["b"])
    return h.reshape(B, Ts, -1)


def adain_resblock_btc(x, s0, sidx, p, kernel_size, dilation):
    """AdaINResBlock1 with fused (AdaIN-modulate + snake) kernels, channel-last.

    Gammas/betas are computed at style resolution and expanded with the composed
    nearest-neighbour index `sidx` (bit-equal to chained nearest interpolation).
    """
    for k in range(3):
        h1 = adain_fc_small(s0, p["adain1"][k])[:, sidx, :]
        xt = adain_snake_btc(x, h1, p["alpha1"][k])                       # bf16 out
        pad1 = (kernel_size * dilation[k] - dilation[k]) // 2
        xt = conv1d_btc(xt, p["convs1"][k]["w"], p["convs1"][k]["b"],
                        dilation=dilation[k], padding=pad1)
        h2 = adain_fc_small(s0, p["adain2"][k])[:, sidx, :]
        xt = adain_snake_btc(xt, h2, p["alpha2"][k])
        pad2 = (kernel_size - 1) // 2
        xt = conv1d_btc(xt, p["convs2"][k]["w"], p["convs2"][k]["b"],
                        dilation=1, padding=pad2)
        x = xt + x
    return x


def sine_gen(f0, key, sr, upsample_scale, harmonic_num=8, sine_amp=0.1,
             noise_std=0.003, voiced_threshold=10.0):
    """SineGen.forward for flag_for_pulse=False. f0: (B, L, 1)."""
    B, L, _ = f0.shape
    dim = harmonic_num + 1
    fn = f0 * jnp.arange(1, dim + 1, dtype=jnp.float32)[None, None, :]
    rad = (fn / sr) % 1.0
    k1, k2 = jax.random.split(key)
    rand_ini = jax.random.uniform(k1, (B, dim), jnp.float32)
    rand_ini = rand_ini.at[:, 0].set(0.0)
    rad = rad.at[:, 0, :].add(rand_ini)

    down_size = int(L // upsample_scale)
    rad_down = interp_linear(jnp.transpose(rad, (0, 2, 1)), down_size)
    phase = jnp.cumsum(jnp.transpose(rad_down, (0, 2, 1)), axis=1) * 2.0 * jnp.pi
    phase_up = interp_linear(jnp.transpose(phase, (0, 2, 1)) * upsample_scale,
                             down_size * upsample_scale)
    sines = jnp.sin(jnp.transpose(phase_up, (0, 2, 1)))

    sine_waves = sines * sine_amp
    uv = (f0 > voiced_threshold).astype(jnp.float32)
    noise_amp = uv * noise_std + (1.0 - uv) * sine_amp / 3.0
    noise = noise_amp * jax.random.normal(k2, sine_waves.shape, jnp.float32)
    sine_waves = sine_waves * uv + noise
    return sine_waves, uv


def source_module(f0_up, key, lin_params, sr, upsample_scale):
    sine_wavs, uv = sine_gen(f0_up, key, sr, upsample_scale)
    # (B, L, 9) x (9, 1): too lane-narrow for the MXU -> VPU weighted sum + tanh in XLA.
    merged = jnp.einsum("bld,do->blo", sine_wavs, lin_params["w"]) + lin_params["b"]
    return jnp.tanh(merged), uv


# ----------------- Conformer (lucidrains-style, eval mode) -------------------

def ff_module(x, p):
    B, T, D = x.shape
    h = layer_norm_pallas(x, p["ln_g"], p["ln_b"], out_dtype=jnp.bfloat16)
    h = pallas_matmul(h.reshape(B * T, D), p["w1"], p["b1"],
                      activation="swish", out_dtype=jnp.bfloat16)   # swish fused in matmul
    h = pallas_matmul(h, p["w2"], p["b2"]).reshape(B, T, D)
    return h


def attention_module(x, p, heads, dim_head, max_pos_emb=512):
    B, T, D = x.shape
    inner = heads * dim_head
    h = layer_norm_pallas(x, p["ln_g"], p["ln_b"], out_dtype=jnp.bfloat16)
    h2 = h.reshape(B * T, D)
    q = pallas_matmul(h2, p["wq"], out_dtype=jnp.bfloat16)
    kv = pallas_matmul(h2, p["wkv"], out_dtype=jnp.bfloat16)
    k, v = kv[:, :inner], kv[:, inner:]

    pair = 2 if heads % 2 == 0 else 1
    G = B * heads // pair

    def to_pairs(t):
        t = t.reshape(B, T, heads // pair, pair, dim_head)
        return jnp.transpose(t, (0, 2, 3, 1, 4)).reshape(G, pair, T, dim_head)

    qh, kh, vh = to_pairs(q), to_pairs(k), to_pairs(v)
    scale = dim_head ** -0.5

    # Shaw rel-pos term: pos[n, r] = q[n] . emb[clip(n - r) + P], built from a small
    # (BHT, Dh) x (Dh, 2P+1) bf16 matmul (padded to a lane-dense width) + gather.
    P = max_pos_emb
    Np = ((2 * P + 1 + 255) // 256) * 256
    embp = jnp.pad(p["rel_emb"], ((0, Np - p["rel_emb"].shape[0]), (0, 0)))
    qe = pallas_matmul(qh.reshape(G * pair * T, dim_head), embp.T,
                       out_dtype=jnp.bfloat16).reshape(G * pair, T, Np)
    seq = jnp.arange(T)
    dist = jnp.clip(seq[:, None] - seq[None, :], -P, P) + P
    # TODO(synk): this gather still materializes an O(T^2) bias (now bf16, half the old
    #             stream); an in-kernel clipped-iota gather would remove it entirely.
    pos = jnp.take_along_axis(qe, jnp.broadcast_to(dist[None], (G * pair, T, T)), axis=-1)
    pos = pos.reshape(G, pair, T, T)

    out = fused_attention(qh, kh, vh, pos, scale)                  # (G, T, pair*Dh) bf16
    out = out.reshape(B, heads // pair, T, pair, dim_head)
    out = jnp.transpose(out, (0, 2, 1, 3, 4)).reshape(B * T, inner)
    out = pallas_matmul(out, p["wo"], p["bo"]).reshape(B, T, D)
    return out


def conformer_conv_module(x, p):
    B, T, D = x.shape
    inner = p["dw_w"].shape[0]
    h = layer_norm_pallas(x, p["ln_g"], p["ln_b"], out_dtype=jnp.bfloat16)
    h = pallas_matmul(h.reshape(B * T, D), p["pw1_w"], p["pw1_b"])      # (B*T, 2*inner)
    a, g = h[:, :inner], h[:, inner:]
    h = (a * jax.nn.sigmoid(g)).reshape(B, T, inner)                    # GLU over channels
    K = p["dw_w"].shape[1]
    pad = (K // 2, K // 2 - (K + 1) % 2)
    bn_scale = 1.0 / math.sqrt(1.0 + 1e-5)  # BatchNorm1d eval w/ fresh stats (see notes)
    h = depthwise_conv_swish(h, p["dw_w"], p["dw_b"], pad, bn_scale,
                             out_dtype=jnp.bfloat16)                    # stays in (B, T, C)
    h = pallas_matmul(h.reshape(B * T, inner), p["pw2_w"], p["pw2_b"]).reshape(B, T, D)
    return h


def conformer_block(x, p, heads, dim_head):
    x = 0.5 * ff_module(x, p["ff1"]) + x
    x = attention_module(x, p["attn"], heads, dim_head) + x
    x = conformer_conv_module(x, p["conv"]) + x
    x = 0.5 * ff_module(x, p["ff2"]) + x
    x = layer_norm_pallas(x, p["post_ln_g"], p["post_ln_b"])
    return x


def conformer(x, blocks, heads=8, dim_head=64):
    for bp in blocks:
        x = conformer_block(x, bp, heads, dim_head)
    return x


# -----------------------------------------------------------------------------
# Parameter init (deterministic, synthetic)
# -----------------------------------------------------------------------------

class KeyGen:
    def __init__(self, key):
        self.key = key

    def __call__(self):
        self.key, sub = jax.random.split(self.key)
        return sub


def init_params(key, cfg):
    kg = KeyGen(key)
    sd = cfg["style_dim"]
    uic = cfg["upsample_initial_channel"]
    n_fft = cfg["gen_istft_n_fft"]
    ur = cfg["upsample_rates"]
    uk = cfg["upsample_kernel_sizes"]
    rk = cfg["resblock_kernel_sizes"]
    num_ups = len(ur)

    def conv_p(cout, cin, k, std=0.01):
        return {"w": std * jax.random.normal(kg(), (cout, cin, k), jnp.float32),
                "b": jnp.zeros((cout,), jnp.float32)}

    def lin_p(din, dout, std=None):
        std = (1.0 / np.sqrt(din)) if std is None else std
        return {"w": std * jax.random.normal(kg(), (din, dout), jnp.float32),
                "b": jnp.zeros((dout,), jnp.float32)}

    def resblock_p(ch, k):
        return {"convs1": [conv_p(ch, ch, k) for _ in range(3)],
                "convs2": [conv_p(ch, ch, k) for _ in range(3)],
                "adain1": [lin_p(sd, 2 * ch) for _ in range(3)],
                "adain2": [lin_p(sd, 2 * ch) for _ in range(3)],
                "alpha1": [jnp.ones((1, ch, 1), jnp.float32) for _ in range(3)],
                "alpha2": [jnp.ones((1, ch, 1), jnp.float32) for _ in range(3)]}

    def conformer_block_p(dim, heads=8, dim_head=64, ff_mult=4, conv_exp=2,
                          conv_kernel=31, max_pos=512):
        inner_attn = heads * dim_head
        inner_conv = dim * conv_exp

        def ff():
            return {"ln_g": jnp.ones((dim,), jnp.float32),
                    "ln_b": jnp.zeros((dim,), jnp.float32),
                    "w1": lin_p(dim, dim * ff_mult)["w"],
                    "b1": jnp.zeros((dim * ff_mult,), jnp.float32),
                    "w2": lin_p(dim * ff_mult, dim)["w"],
                    "b2": jnp.zeros((dim,), jnp.float32)}

        return {"ff1": ff(), "ff2": ff(),
                "attn": {"ln_g": jnp.ones((dim,), jnp.float32),
                         "ln_b": jnp.zeros((dim,), jnp.float32),
                         "wq": lin_p(dim, inner_attn)["w"],
                         "wkv": lin_p(dim, 2 * inner_attn)["w"],
                         "wo": lin_p(inner_attn, dim)["w"],
                         "bo": jnp.zeros((dim,), jnp.float32),
                         "rel_emb": 0.02 * jax.random.normal(kg(), (2 * max_pos + 1, dim_head),
                                                             jnp.float32)},
                "conv": {"ln_g": jnp.ones((dim,), jnp.float32),
                         "ln_b": jnp.zeros((dim,), jnp.float32),
                         "pw1_w": lin_p(dim, 2 * inner_conv)["w"],
                         "pw1_b": jnp.zeros((2 * inner_conv,), jnp.float32),
                         "dw_w": 0.1 * jax.random.normal(kg(), (inner_conv, conv_kernel),
                                                         jnp.float32),
                         "dw_b": jnp.zeros((inner_conv,), jnp.float32),
                         "pw2_w": lin_p(inner_conv, dim)["w"],
                         "pw2_b": jnp.zeros((dim,), jnp.float32)},
                "post_ln_g": jnp.ones((dim,), jnp.float32),
                "post_ln_b": jnp.zeros((dim,), jnp.float32)}

    params = {}
    params["alphas"] = ([jnp.ones((1, uic, 1), jnp.float32)]
                        + [jnp.ones((1, uic // 2 ** (i + 1), 1), jnp.float32)
                           for i in range(num_ups)])
    params["ups"] = []
    for i, (u, k) in enumerate(zip(ur, uk)):
        cin = uic // 2 ** i
        cout = uic // 2 ** (i + 1)
        params["ups"].append({"w": 0.01 * jax.random.normal(kg(), (cin, cout, k), jnp.float32),
                              "b": jnp.zeros((cout,), jnp.float32)})

    params["resblocks"] = []
    params["noise_convs"] = []
    params["noise_res"] = []
    for i in range(num_ups):
        ch = uic // 2 ** (i + 1)
        for k in rk:
            params["resblocks"].append(resblock_p(ch, k))
        if i + 1 < num_ups:
            sf = math.prod(ur[i + 1:])
            params["noise_convs"].append(conv_p(ch, n_fft + 2, sf * 2))
            params["noise_res"].append(resblock_p(ch, 7))
        else:
            params["noise_convs"].append(conv_p(ch, n_fft + 2, 1))
            params["noise_res"].append(resblock_p(ch, 11))

    params["conformers"] = []
    for i in range(num_ups):
        dim = uic // 2 ** i
        params["conformers"].append([conformer_block_p(dim) for _ in range(2)])

    params["conv_post"] = conv_p(n_fft + 2, 128, 7)     # Conv1d(128, n_fft+2, 7) is hardcoded
    params["source_linear"] = lin_p(9, 1)               # harmonic_num=8 -> 9 -> 1
    return params


# -----------------------------------------------------------------------------
# Full forward
# -----------------------------------------------------------------------------

def ringformer_forward(params, mel, style, pitch, energy, noise_key, cfg):
    del energy  # unused in the reference forward
    ur = cfg["upsample_rates"]
    uk = cfg["upsample_kernel_sizes"]
    rk = cfg["resblock_kernel_sizes"]
    rd = cfg["resblock_dilation_sizes"]
    n_fft = cfg["gen_istft_n_fft"]
    hop = cfg["gen_istft_hop_size"]
    num_ups = len(ur)
    num_kernels = len(rk)
    total_up = math.prod(ur) * hop

    # ---- harmonic source branch (torch.no_grad block) ----
    f0 = interp_linear(pitch[:, None, :].astype(jnp.float32), pitch.shape[-1] * total_up)
    f0 = jnp.transpose(f0, (0, 2, 1))                         # (B, L, 1)
    har_source, _uv = source_module(f0, noise_key, params["source_linear"],
                                    cfg["sample_rate"], total_up)
    har_source = har_source[:, :, 0]                          # (B, L)

    window = hann_window(n_fft)
    fwd = stft(har_source, n_fft, hop, window)                # (B, F, bins) channel-last
    mag = jnp.abs(fwd) + 1e-9
    har_spec = jnp.abs(fwd)
    har_x = jnp.real(fwd) / mag
    har_y = jnp.imag(fwd) / mag
    har_phase = jnp.arctan2(har_y, har_x)
    har = jnp.concatenate([har_spec, har_phase], axis=-1)     # (B, F, n_fft+2)

    # ---- channel-last activations for the whole upsample stack ----
    x = jnp.transpose(mel.astype(jnp.float32), (0, 2, 1))      # (B, T, C)
    s0 = jnp.transpose(style.astype(jnp.float32), (0, 2, 1))   # (B, Ts, SD)
    sidx = jnp.arange(s0.shape[1], dtype=jnp.int32)            # composed nearest index

    for i in range(num_ups):
        x = snake_btc(x, params["alphas"][i])
        x = conformer(x, params["conformers"][i], heads=8, dim_head=64)
        u, k = ur[i], uk[i]
        x = conv_transpose1d_btc(x, params["ups"][i]["w"], params["ups"][i]["b"],
                                 stride=u, padding=(k - u) // 2)
        T_new = x.shape[1]
        sidx = sidx[nearest_idx(T_new, sidx.shape[0])]

        nc = params["noise_convs"][i]
        if i + 1 < num_ups:
            sf = math.prod(ur[i + 1:])
            x_source = conv1d_btc_strided(har, nc["w"], nc["b"], stride=sf,
                                          padding=(sf + 1) // 2)
        else:
            x_source = conv1d_btc(har, nc["w"], nc["b"])
        # TODO(synk): the reference defines ReflectionPad1d((1,0)) but never calls it, leaving
        # a one-frame length mismatch at the last stage; we trim x_source to x's length.
        x_source = x_source[:, :T_new, :]

        nr_kernel = 7 if i + 1 < num_ups else 11
        x_source = adain_resblock_btc(x_source, s0, sidx, params["noise_res"][i],
                                      nr_kernel, [1, 3, 5])
        x = x + x_source

        xs = None
        for j in range(num_kernels):
            rb = adain_resblock_btc(x, s0, sidx, params["resblocks"][i * num_kernels + j],
                                    rk[j], rd[j])
            xs = rb if xs is None else xs + rb
        x = xs / num_kernels

    x = snake_btc(x, params["alphas"][num_ups])
    x = conv1d_btc(x, params["conv_post"]["w"], params["conv_post"]["b"], padding=3)
    x = jnp.transpose(x, (0, 2, 1))                            # tiny 18-channel tensor

    spec = jnp.abs(x[:, :n_fft // 2 + 1, :]) ** 3 + 1e-9
    phase = x[:, n_fft // 2 + 1:, :]
    x_phase = jnp.cos(phase)
    y_phase = jnp.sin(phase)
    audio = istft(spec * (x_phase + 1j * y_phase), n_fft, hop, window)[:, None, :]
    return {"audio": audio, "magnitude": spec, "x": x_phase, "y": y_phase}


# -----------------------------------------------------------------------------
# Main
# -----------------------------------------------------------------------------

if __name__ == "__main__":
    cfg = dict(
        style_dim=16,
        resblock_kernel_sizes=[3],
        upsample_rates=[10],
        upsample_initial_channel=256,      # 256 -> 128 so conv_post's hardcoded 128 matches
        resblock_dilation_sizes=[[1, 3, 5]],
        upsample_kernel_sizes=[20],
        gen_istft_n_fft=16,
        gen_istft_hop_size=4,
        sample_rate=24000,
    )

    key = jax.random.PRNGKey(0)
    k_param, k_mel, k_style, k_pitch, k_noise = jax.random.split(key, 5)
    params = init_params(k_param, cfg)

    B, T_mel = 2, 8
    mel = jax.random.normal(k_mel, (B, cfg["upsample_initial_channel"], T_mel), jnp.float32)
    style = jax.random.normal(k_style, (B, cfg["style_dim"], T_mel), jnp.float32)
    pitch = 100.0 + 50.0 * jax.random.uniform(k_pitch, (B, T_mel), jnp.float32)
    energy = jnp.ones((B, T_mel), jnp.float32)

    out = ringformer_forward(params, mel, style, pitch, energy, k_noise, cfg)
    jax.block_until_ready(out["audio"])
    assert out["audio"].shape[0] == B and out["audio"].shape[1] == 1
    assert out["magnitude"].shape == (B, cfg["gen_istft_n_fft"] // 2 + 1,
                                      T_mel * cfg["upsample_rates"][0])
    print("KERNEL_OK")
</pallas_src>

<mosaic_0001>
module attributes {stable_mosaic.version = 11 : i64} {
  func.func @_snake_kernel(%arg0: i32, %arg1: i32, %arg2: i32, %arg3: memref<1x8x256xf32, #tpu.memory_space<vmem>>, %arg4: memref<1x1x256xf32, #tpu.memory_space<vmem>>, %arg5: memref<1x8x256xf32, #tpu.memory_space<vmem>>) attributes {dimension_semantics = [#tpu.dimension_semantics<parallel>, #tpu.dimension_semantics<parallel>, #tpu.dimension_semantics<parallel>], iteration_bounds = array<i64: 2, 1, 1>, scalar_prefetch = 0 : i64, scratch_operands = 0 : i64, tpu.core_type = #tpu.core_type<tc>, window_params = [{transform_indices = @transform_0, window_bounds = array<i64: 1, 8, 256>}, {transform_indices = @transform_1, window_bounds = array<i64: 1, 1, 256>}, {transform_indices = @transform_2, window_bounds = array<i64: 1, 8, 256>}]} {
    %c0 = arith.constant 0 : index
    %c0_0 = arith.constant 0 : index
    %c0_1 = arith.constant 0 : index
    %0 = vector.load %arg3[%c0, %c0_0, %c0_1] : memref<1x8x256xf32, #tpu.memory_space<vmem>>, vector<1x8x256xf32>
    %c0_2 = arith.constant 0 : index
    %c0_3 = arith.constant 0 : index
    %c0_4 = arith.constant 0 : index
    %1 = vector.load %arg4[%c0_2, %c0_3, %c0_4] : memref<1x1x256xf32, #tpu.memory_space<vmem>>, vector<1x1x256xf32>
    %cst = arith.constant 1.000000e+00 : f32
    %2 = vector.broadcast %cst : f32 to vector<1x1x256xf32>
    %3 = arith.divf %2, %1 : vector<1x1x256xf32>
    %4 = vector.broadcast %1 : vector<1x1x256xf32> to vector<1x8x256xf32>
    %5 = arith.mulf %4, %0 : vector<1x8x256xf32>
    %6 = math.sin %5 : vector<1x8x256xf32>
    %7 = arith.mulf %6, %6 : vector<1x8x256xf32>
    %8 = vector.broadcast %3 : vector<1x1x256xf32> to vector<1x8x256xf32>
    %9 = arith.mulf %7, %8 : vector<1x8x256xf32>
    %10 = arith.addf %0, %9 : vector<1x8x256xf32>
    %c0_5 = arith.constant 0 : index
    %c0_6 = arith.constant 0 : index
    %c0_7 = arith.constant 0 : index
    %11 = vector.load %arg5[%c0_5, %c0_6, %c0_7] : memref<1x8x256xf32, #tpu.memory_space<vmem>>, vector<1x8x256xf32>
    tpu.vector_store %arg5[%c0_5, %c0_6, %c0_7], %10 {strides = array<i32>} : memref<1x8x256xf32, #tpu.memory_space<vmem>>, vector<1x8x256xf32>,
    return
  }
  func.func @transform_0(%arg0: i32, %arg1: i32, %arg2: i32) -> (i32, i32, i32) {
    %c0_i32 = arith.constant 0 : i32
    return %arg0, %arg1, %arg2 : i32, i32, i32
  }
  func.func @transform_1(%arg0: i32, %arg1: i32, %arg2: i32) -> (i32, i32, i32) {
    %c0_i32 = arith.constant 0 : i32
    %c0_i32_0 = arith.constant 0 : i32
    %c0_i32_1 = arith.constant 0 : i32
    return %c0_i32, %c0_i32_0, %arg2 : i32, i32, i32
  }
  func.func @transform_2(%arg0: i32, %arg1: i32, %arg2: i32) -> (i32, i32, i32) {
    %c0_i32 = arith.constant 0 : i32
    return %arg0, %arg1, %arg2 : i32, i32, i32
  }
}

</mosaic_0001>

<llo_original>
// kernel: tpu_custom_call.1
$region0: #{tpu_custom_call.1}
  #allocation0 [shape = 'u32[]', space=smem, size = 0x4, offset = 0x4, fixed_abs, tag = 'smem constant byte address 0x4 - core index']
  #allocation1 [shape = 'u32[144,128]{1,0:T(1,128)}', space=vmem, size = 0x12000, scoped, tag = 'internal scratch']
  %s0 = inlined_call_operand.hbm [shape: f32[2,8,256], index: 0, kind: input, shape index: {}]
  %s1 = inlined_call_operand.hbm [shape: f32[1,1,256], index: 1, kind: input, shape index: {}]
  %s2 = inlined_call_operand.hbm [shape: f32[2,8,256], index: 2, kind: output, shape index: {}]
  %s3 = sld [smem:[#allocation0]]
  $region49: #{tpu_custom_call.1} parent=0
    _
  %s5 = ssub.s32 1, %s3
  %s6 = scalar_select 0, %s5, %s3
  $region1: #{tpu_custom_call.1} parent=0
    #allocation2 [shape = 'u8[16384]{0}', space=vmem, size = 0x4000, scoped, tag = 'input window, operand 0']
    #allocation3 [shape = 's32[2]{0}', space=sflag, size = 0x8, scoped, tag = 'scoped memory for tpu_custom_call.1']
    #allocation4 [shape = 's32[2]{0}', space=sflag, size = 0x8, scoped, tag = 'scoped memory for tpu_custom_call.1']
    #allocation5 [shape = 'u8[1024]{0}', space=vmem, size = 0x400, scoped, tag = 'input window, operand 1, single buffered']
    #allocation6 [shape = 's32[1]{0}', space=sflag, size = 0x4, scoped, tag = 'scoped memory for tpu_custom_call.1']
    #allocation7 [shape = 'u8[16384]{0}', space=vmem, size = 0x4000, scoped, tag = 'output window, operand 0']
    %7 = vsyncpa [#allocation3], 0
    %s8 = scalar_lea.sflag [#allocation3], 1
    %9 = vsyncpa %s8, 0
    %10 = vsyncpa [#allocation6], 0
    %11 = vsyncpa [#allocation4], 0
    %s12 = scalar_lea.sflag [#allocation4], 1
    %13 = vsyncpa %s12, 0
    loop: start=0, step=1, limit=4
    $region2: #{tpu_custom_call.1} parent=1 // loop_pre_header
      _
    $region3: #{tpu_custom_call.1} parent=1 // loop_header
      %s15 = sphi 0, %s19
      %p16 = scmp.ge.s32.totalorder %s15, 4
      %s22 = sphi 0, %s41
      %s23 = sphi 0, %s37
      %s24 = sphi 0, %s33
      %s25 = sphi 0, %s22
      %s26 = sphi 0, %s23
      %s27 = sphi 0, %s24
      %s28 = sphi 0, %s25
      %s29 = sphi 0, %s26
      %s30 = sphi 0, %s27
      %s48 = sphi 0, %s50
      %s51 = sphi 0, %s48
      %s52 = sphi 0, %s51
      %s68 = sphi 0, %s52
      %s74 = sphi 0, %s76
      %s77 = sphi 0, %s74
      %s78 = sphi 0, %s77
      %s94 = sphi 0, %s78
      %s104 = sphi 0, %s106
      %s107 = sphi 0, %s104
      %s108 = sphi 0, %s107
      %s124 = sphi 0, %s108
    $region4: #{tpu_custom_call.1} parent=1 // loop_header_branch
      %18 = sbr.rel (%p16) target = $region8
    $region5: #{tpu_custom_call.1} parent=1 // loop_body
      %s20 = ssub.s32 %s15, 1
      %s21 = ssub.s32 %s15, 2
      %s31 = sadd.s32 1, %s24
      %p32 = scmp.ge.s32.totalorder %s31, 1
      %s33 = scalar_select %p32, 0, %s31
      %s34 = sadd.s32 1, %s23
      %s35 = scalar_select %p32, %s34, %s23
      %p36 = scmp.ge.s32.totalorder %s35, 1
      %s37 = scalar_select %p36, 0, %s35
      %s38 = sadd.s32 1, %s22
      %s39 = scalar_select %p36, %s38, %s22
      %p40 = scmp.ge.s32.totalorder %s39, 2
      %s41 = scalar_select %p40, 0, %s39
      %s42 = ssub.s32 %s22, %s41
      %s43 = ssub.s32 %s23, %s37
      %s44 = sor.u32 %s42, %s43
      %s45 = ssub.s32 %s24, %s33
      %s46 = sor.u32 %s44, %s45
      %p47 = scmp.eq.s32.totalorder %s46, 0
      %s49 = sadd.s32 %s48, 1
      %s50 = scalar_select %p47, %s48, %s49
      %p53 = pneg %p47
      %p54 = scmp.eq.s32.totalorder %s15, 1
      %p55 = por %p53, %p54
      %p56 = scmp.ne.s32.totalorder %s48, %s51
      %p57 = scmp.eq.s32.totalorder %s15, 0
      %p58 = por %p56, %p57
      %p59 = scmp.ne.s32.totalorder %s48, %s51
      %p60 = scmp.eq.s32.totalorder %s20, 1
      %p61 = por %p59, %p60
      %p62 = scmp.ne.s32.totalorder %s51, %s52
      %p63 = scmp.eq.s32.totalorder %s20, 0
      %p64 = por %p62, %p63
      %p65 = scmp.ne.s32.totalorder %s51, %s52
      %p66 = scmp.eq.s32.totalorder %s21, 1
      %p67 = por %p65, %p66
      %p69 = scmp.ne.s32.totalorder %s52, %s68
      %p70 = scmp.eq.s32.totalorder %s21, 0
      %p71 = por %p69, %p70
      %s72 = ssub.s32 %s24, %s33
      %p73 = scmp.eq.s32.totalorder %s72, 0
      %s75 = sadd.s32 %s74, 1
      %s76 = scalar_select %p73, %s74, %s75
      %p79 = pneg %p73
      %p80 = scmp.eq.s32.totalorder %s15, 1
      %p81 = por %p79, %p80
      %p82 = scmp.ne.s32.totalorder %s74, %s77
      %p83 = scmp.eq.s32.totalorder %s15, 0
      %p84 = por %p82, %p83
      %p85 = scmp.ne.s32.totalorder %s74, %s77
      %p86 = scmp.eq.s32.totalorder %s20, 1
      %p87 = por %p85, %p86
      %p88 = scmp.ne.s32.totalorder %s77, %s78
      %p89 = scmp.eq.s32.totalorder %s20, 0
      %p90 = por %p88, %p89
      %p91 = scmp.ne.s32.totalorder %s77, %s78
      %p92 = scmp.eq.s32.totalorder %s21, 1
      %p93 = por %p91, %p92
      %p95 = scmp.ne.s32.totalorder %s78, %s94
      %p96 = scmp.eq.s32.totalorder %s21, 0
      %p97 = por %p95, %p96
      %s98 = ssub.s32 %s22, %s41
      %s99 = ssub.s32 %s23, %s37
      %s100 = sor.u32 %s98, %s99
      %s101 = ssub.s32 %s24, %s33
      %s102 = sor.u32 %s100, %s101
      %p103 = scmp.eq.s32.totalorder %s102, 0
      %s105 = sadd.s32 %s104, 1
      %s106 = scalar_select %p103, %s104, %s105
      %p109 = pneg %p103
      %p110 = scmp.eq.s32.totalorder %s15, 1
      %p111 = por %p109, %p110
      %p112 = scmp.ne.s32.totalorder %s104, %s107
      %p113 = scmp.eq.s32.totalorder %s15, 0
      %p114 = por %p112, %p113
      %p115 = scmp.ne.s32.totalorder %s104, %s107
      %p116 = scmp.eq.s32.totalorder %s20, 1
      %p117 = por %p115, %p116
      %p118 = scmp.ne.s32.totalorder %s107, %s108
      %p119 = scmp.eq.s32.totalorder %s20, 0
      %p120 = por %p118, %p119
      %p121 = scmp.ne.s32.totalorder %s107, %s108
      %p122 = scmp.eq.s32.totalorder %s21, 1
      %p123 = por %p121, %p122
      %p125 = scmp.ne.s32.totalorder %s108, %s124
      %p126 = scmp.eq.s32.totalorder %s21, 0
      %p127 = por %p125, %p126
      %p128 = scmp.le.s32.totalorder 1, %s15
      %p129 = scmp.lt.s32.totalorder %s15, 3
      %p130 = pnand %p128, %p129
      %p131 = pneg %p130
      // Predicated region
      $region9: #{tpu_custom_call.1} parent=5 // pred_check
        _
      $region10: #{tpu_custom_call.1} parent=5 // pred_check_branch
        %133 = sbr.rel (%p130) target = $region12
      $region11: #{tpu_custom_call.1} parent=5 // pred_region
        %s134 = ssub.s32 %s15, 1
        // Predicated region
        $region13: #{tpu_custom_call.1} parent=11 // pred_check
          %p135 = pneg %p90
        $region14: #{tpu_custom_call.1} parent=11 // pred_check_branch
          %137 = sbr.rel (%p135) target = $region16
        $region15: #{tpu_custom_call.1} parent=11 // pred_region
          %s138 = smul.u32 2, %s27
          %s140 = ssub.s32 32, 32
          %141 = vsyncadd [#allocation6], %s140
          %s142 = smul.addr %s138, 16
          %s143 = scalar_lea.hbm %s1, %s142
          %s145 = sshll.u32 [#allocation5], 4
          %s146 = int_to_ptr.vmem [resolvable:$true] %s145
          %148 = dma.hbm_to_vmem [thread:$0]  %s143, 32, %s146, [#allocation6]
        $region16: #{tpu_custom_call.1} parent=11 // pred_fallthru
          _
      $region12: #{tpu_custom_call.1} parent=5 // pred_fallthru
        _
      %p149 = scmp.lt.s32.totalorder %s15, 2
      // Predicated region
      $region17: #{tpu_custom_call.1} parent=5 // pred_check
        %p150 = pneg %p149
      $region18: #{tpu_custom_call.1} parent=5 // pred_check_branch
        %152 = sbr.rel (%p150) target = $region20
      $region19: #{tpu_custom_call.1} parent=5 // pred_region
        // Predicated region
        $region21: #{tpu_custom_call.1} parent=19 // pred_check
          %p153 = pneg %p58
        $region22: #{tpu_custom_call.1} parent=19 // pred_check_branch
          %155 = sbr.rel (%p153) target = $region24
        $region23: #{tpu_custom_call.1} parent=19 // pred_region
          %s156 = sand.u32 %s48, 1
          %s157 = scalar_lea.sflag [#allocation3], %s156
          %s158 = sand.u32 %s48, 1
          %s159 = smul.addr %s158, 16
          %s160 = scalar_lea.vmem [#allocation2], %s159
          %s161 = smul.u32 2, %s24
          %s163 = ssub.s32 256, 256
          %164 = vsyncadd %s157, %s163
          %s165 = smul.addr %s23, 2
          %s166 = sadd.s32 %s161, %s165
          %s167 = smul.addr %s22, 2
          %s168 = sadd.s32 %s166, %s167
          %s169 = smul.addr %s168, 128
          %s170 = scalar_lea.hbm %s0, %s169
          %s172 = sshll.u32 %s160, 4
          %s173 = int_to_ptr.vmem [resolvable:$true] %s172
          %175 = dma.hbm_to_vmem [thread:$0]  %s170, 256, %s173, %s157
        $region24: #{tpu_custom_call.1} parent=19 // pred_fallthru
          _
      $region20: #{tpu_custom_call.1} parent=5 // pred_fallthru
        _
      %p176 = scmp.le.s32.totalorder 1, %s15
      %p177 = scmp.lt.s32.totalorder %s15, 3
      %p178 = pnand %p176, %p177
      %p179 = pneg %p178
      // Predicated region
      $region25: #{tpu_custom_call.1} parent=5 // pred_check
        _
      $region26: #{tpu_custom_call.1} parent=5 // pred_check_branch
        %181 = sbr.rel (%p178) target = $region28
      $region27: #{tpu_custom_call.1} parent=5 // pred_region
        %s182 = ssub.s32 %s15, 1
        %s183 = sand.u32 %s51, 1
        %s184 = scalar_lea.sflag [#allocation3], %s183
        %s185 = sand.u32 %s51, 1
        %s186 = smul.addr %s185, 16
        %s187 = scalar_lea.vmem [#allocation2], %s186
        // Predicated region
        $region29: #{tpu_custom_call.1} parent=27 // pred_check
          %p188 = pneg %p64
        $region30: #{tpu_custom_call.1} parent=27 // pred_check_branch
          %190 = sbr.rel (%p188) target = $region32
        $region31: #{tpu_custom_call.1} parent=27 // pred_region
          %191 = dma.done %s184, 256
        $region32: #{tpu_custom_call.1} parent=27 // pred_fallthru
          _
        // Predicated region
        $region33: #{tpu_custom_call.1} parent=27 // pred_check
          %p192 = pneg %p90
        $region34: #{tpu_custom_call.1} parent=27 // pred_check_branch
          %194 = sbr.rel (%p192) target = $region36
        $region35: #{tpu_custom_call.1} parent=27 // pred_region
          %195 = dma.done [#allocation6], 32
        $region36: #{tpu_custom_call.1} parent=27 // pred_fallthru
          _
        %s196 = sand.u32 %s51, 1
        %s197 = scalar_lea.sflag [#allocation3], %s196
        %s198 = sand.u32 %s51, 1
        %s199 = smul.addr %s198, 16
        %s200 = scalar_lea.vmem [#allocation2], %s199
        %p201 = pneg %p64
        %p202 = pneg %p61
        %p203 = pneg %p90
        %p204 = pneg %p87
        %p205 = pneg %p120
        %p206 = pneg %p117
        %s207 = sand.u32 %s107, 1
        %s208 = scalar_lea.sflag [#allocation4], %s207
        %s209 = sand.u32 %s107, 1
        %s210 = smul.addr %s209, 16
        %s211 = scalar_lea.vmem [#allocation7], %s210
        %s212 = smul.u32 2, %s27
        %s213 = smul.u32 2, %s27
        %s214 = smul.u32 2, %s27
        %v215 = vld [vmem:[%s187] sm:$0xff]
        %v216 = vld [vmem:[%s187 + $0x8] sm:$0xff]
        %v217 = vld [vmem:[#allocation5] sm:$0x3]
        %v218 = vrcp.pop %v217
        %v219 = vmul.f32 1.0, %v218
        %v221 = vlaneseq
        %v222 = vshrl.u32 %v221, 7
        %v223 = vsub.s32 0, %v222
        %v224 = vrot.slane %v217, %v223
        %v225 = vlaneseq
        %v226 = vshrl.u32 %v225, 7
        %v227 = vsub.s32 1, %v226
        %v228 = vrot.slane %v217, %v227
        %v231 = vmul.f32 %v224, %v215
        %v232 = vmul.f32 %v228, %v216
        %v233 = vand.u32 2147483647, %v231
        %vm234 = vcmp.le.f32.partialorder %v233, 0.7853982
        %vm235 = vcmp.lt.s32.totalorder %v231, 0
        %v236 = vand.u32 %v231, 2139095040
        %v237 = vshrl.u32 %v236, 23
        %v238 = vsub.s32 %v237, 127
        %v239 = vand.u32 2147483647, %v231
        %v240 = vand.u32 %v239, 8388607
        %v241 = vor.u32 %v240, 8388608
        %v242 = vsub.s32 0, %v241
        %v243 = vadd.s32 %v238, 1
        %vm244 = vcmp.gt.s32.totalorder %v243, 0
        %v245 = vsel %vm244, %v243, 0
        %v246 = vshrl.u32 %v245, 5
        %v247 = vand.u32 %v245, 31
        %v248 = vsub.s32 32, %v247
        %v249 = vshrl.u32 683565275, %v248
        %v250 = vshll.u32 683565275, %v247
        %v251 = vshrl.u32 2475754826, %v248
        %v252 = vor.u32 %v250, %v251
        %v253 = vshll.u32 2475754826, %v247
        %v254 = vshrl.u32 2131351028, %v248
        %v255 = vor.u32 %v253, %v254
        %v256 = vshll.u32 2131351028, %v247
        %v257 = vshrl.u32 2102212464, %v248
        %v258 = vor.u32 %v256, %v257
        %v259 = vshll.u32 2102212464, %v247
        %v260 = vshrl.u32 920167782, %v248
        %v261 = vor.u32 %v259, %v260
        %v262 = vshll.u32 920167782, %v247
        %v263 = vshrl.u32 1326507024, %v248
        %v264 = vor.u32 %v262, %v263
        %vm265 = vcmp.lt.s32.totalorder %v246, 1
        %vm266 = vcmp.lt.s32.totalorder %v246, 2
        %vm267 = vcmp.lt.s32.totalorder %v246, 3
        %vm268 = vcmp.lt.s32.totalorder %v246, 4
        %v269 = vsel %vm265, %v249, %v252
        %v270 = vsel %vm268, %v258, 2102212464
        %v271 = vsel %vm267, %v255, %v270
        %v272 = vsel %vm266, %v269, %v271
        %v273 = vsel %vm265, %v252, %v255
        %v274 = vsel %vm268, %v261, 920167782
        %v275 = vsel %vm267, %v258, %v274
        %v276 = vsel %vm266, %v273, %v275
        %v277 = vsel %vm265, %v255, %v258
        %v278 = vsel %vm268, %v264, 1326507024
        %v279 = vsel %vm267, %v261, %v278
        %v280 = vsel %vm266, %v277, %v279
        %v281 = vshll.u32 %v241, 8
        %v282 = vmul.u32.u64.compose %v281, %v280
        %v283 = vextract.low.u32 %v282
        %v284 = vextract.high.u32 %v282
        %v285 = vmul.u32.u64.compose %v281, %v276
        %v286 = vextract.low.u32 %v285
        %v287 = vextract.high.u32 %v285
        %v288 = vmul.u32 %v281, %v272
        %v289 = vadd.s32 %v284, %v286
        %vm290 = vc.u32 %v284, %v286
        %v291 = vadd.s32 %v287, 1
        %v292 = vsel %vm290, %v291, %v287
        %v293 = vadd.s32 %v288, %v292
        %v294 = vadd.s32 %v293, 536870912
        %v295 = vshrl.u32 %v294, 30
        %v296 = vshll.u32 %v295, 30
        %v297 = vsub.s32 %v293, %v296
        %vm298 = vcmp.lt.s32.totalorder %v297, 0
        %v299 = vsub.s32 0, %v297
        %v300 = vsel %vm298, %v299, %v297
        %v301 = vclz %v300
        %v302 = vsub.s32 %v301, 2
        %vm303 = vcmp.gt.s32.totalorder 0, %v302
        %v304 = vsel %vm303, 0, %v302
        %v305 = vsub.s32 32, %v304
        %v306 = vshll.u32 %v297, %v304
        %v307 = vshrl.u32 %v289, %v305
        %v308 = vor.u32 %v306, %v307
        %v309 = vsub.s32 4294967266, %v304
        %v310 = vadd.s32 %v309, 127
        %v311 = vshll.u32 %v310, 23
        %v312 = vor.u32 4788187, %v311
        %v313 = vand.u32 2147483647, %v312
        %v315 = vcvt.s32.f32 %v308
        %v316 = vmul.f32 %v315, %v313
        %v317 = vxor.u32 %v316, 2147483648
        %v318 = vsel %vm235, %v317, %v316
        %v319 = vsub.s32 4, %v295
        %v320 = vsel %vm235, %v319, %v295
        %v321 = vsel %vm234, %v231, %v318
        %v322 = vsel %vm234, 0, %v320
        %v323 = vcosq.f32.pop %v321
        %v324 = vsinq.f32.pop %v321
        %vm325 = vweird.f32 %v231
        %v326 = vadd.s32 %v322, 3
        %v327 = vand.u32 %v326, 3
        %vm328 = vcmp.lt.s32.totalorder %v327, 2
        %vm329 = vcmp.eq.s32.totalorder %v327, 0
        %v330 = vxor.u32 %v324, 2147483648
        %v331 = vsel %vm329, %v323, %v330
        %vm332 = vcmp.eq.s32.totalorder %v327, 2
        %v333 = vxor.u32 %v323, 2147483648
        %v334 = vsel %vm332, %v333, %v324
        %v335 = vsel %vm328, %v331, %v334
        %v336 = vsel %vm325, nan, %v335
        %v337 = vand.u32 2147483647, %v232
        %vm338 = vcmp.le.f32.partialorder %v337, 0.7853982
        %vm339 = vcmp.lt.s32.totalorder %v232, 0
        %v340 = vand.u32 %v232, 2139095040
        %v341 = vshrl.u32 %v340, 23
        %v342 = vsub.s32 %v341, 127
        %v343 = vand.u32 2147483647, %v232
        %v344 = vand.u32 %v343, 8388607
        %v345 = vor.u32 %v344, 8388608
        %v346 = vsub.s32 0, %v345
        %v347 = vadd.s32 %v342, 1
        %vm348 = vcmp.gt.s32.totalorder %v347, 0
        %v349 = vsel %vm348, %v347, 0
        %v350 = vshrl.u32 %v349, 5
        %v351 = vand.u32 %v349, 31
        %v352 = vsub.s32 32, %v351
        %v353 = vshrl.u32 683565275, %v352
        %v354 = vshll.u32 683565275, %v351
        %v355 = vshrl.u32 2475754826, %v352
        %v356 = vor.u32 %v354, %v355
        %v357 = vshll.u32 2475754826, %v351
        %v358 = vshrl.u32 2131351028, %v352
        %v359 = vor.u32 %v357, %v358
        %v360 = vshll.u32 2131351028, %v351
        %v361 = vshrl.u32 2102212464, %v352
        %v362 = vor.u32 %v360, %v361
        %v363 = vshll.u32 2102212464, %v351
        %v364 = vshrl.u32 920167782, %v352
        %v365 = vor.u32 %v363, %v364
        %v366 = vshll.u32 920167782, %v351
        %v367 = vshrl.u32 1326507024, %v352
        %v368 = vor.u32 %v366, %v367
        %vm369 = vcmp.lt.s32.totalorder %v350, 1
        %vm370 = vcmp.lt.s32.totalorder %v350, 2
        %vm371 = vcmp.lt.s32.totalorder %v350, 3
        %vm372 = vcmp.lt.s32.totalorder %v350, 4
        %v373 = vsel %vm369, %v353, %v356
        %v374 = vsel %vm372, %v362, 2102212464
        %v375 = vsel %vm371, %v359, %v374
        %v376 = vsel %vm370, %v373, %v375
        %v377 = vsel %vm369, %v356, %v359
        %v378 = vsel %vm372, %v365, 920167782
        %v379 = vsel %vm371, %v362, %v378
        %v380 = vsel %vm370, %v377, %v379
        %v381 = vsel %vm369, %v359, %v362
        %v382 = vsel %vm372, %v368, 1326507024
        %v383 = vsel %vm371, %v365, %v382
        %v384 = vsel %vm370, %v381, %v383
        %v385 = vshll.u32 %v345, 8
        %v386 = vmul.u32.u64.compose %v385, %v384
        %v387 = vextract.low.u32 %v386
        %v388 = vextract.high.u32 %v386
        %v389 = vmul.u32.u64.compose %v385, %v380
        %v390 = vextract.low.u32 %v389
        %v391 = vextract.high.u32 %v389
        %v392 = vmul.u32 %v385, %v376
        %v393 = vadd.s32 %v388, %v390
        %vm394 = vc.u32 %v388, %v390
        %v395 = vadd.s32 %v391, 1
        %v396 = vsel %vm394, %v395, %v391
        %v397 = vadd.s32 %v392, %v396
        %v398 = vadd.s32 %v397, 536870912
        %v399 = vshrl.u32 %v398, 30
        %v400 = vshll.u32 %v399, 30
        %v401 = vsub.s32 %v397, %v400
        %vm402 = vcmp.lt.s32.totalorder %v401, 0
        %v403 = vsub.s32 0, %v401
        %v404 = vsel %vm402, %v403, %v401
        %v405 = vclz %v404
        %v406 = vsub.s32 %v405, 2
        %vm407 = vcmp.gt.s32.totalorder 0, %v406
        %v408 = vsel %vm407, 0, %v406
        %v409 = vsub.s32 32, %v408
        %v410 = vshll.u32 %v401, %v408
        %v411 = vshrl.u32 %v393, %v409
        %v412 = vor.u32 %v410, %v411
        %v413 = vsub.s32 4294967266, %v408
        %v414 = vadd.s32 %v413, 127
        %v415 = vshll.u32 %v414, 23
        %v416 = vor.u32 4788187, %v415
        %v417 = vand.u32 2147483647, %v416
        %v419 = vcvt.s32.f32 %v412
        %v420 = vmul.f32 %v419, %v417
        %v421 = vxor.u32 %v420, 2147483648
        %v422 = vsel %vm339, %v421, %v420
        %v423 = vsub.s32 4, %v399
        %v424 = vsel %vm339, %v423, %v399
        %v425 = vsel %vm338, %v232, %v422
        %v426 = vsel %vm338, 0, %v424
        %v427 = vcosq.f32.pop %v425
        %v428 = vsinq.f32.pop %v425
        %vm429 = vweird.f32 %v232
        %v430 = vadd.s32 %v426, 3
        %v431 = vand.u32 %v430, 3
        %vm432 = vcmp.lt.s32.totalorder %v431, 2
        %vm433 = vcmp.eq.s32.totalorder %v431, 0
        %v434 = vxor.u32 %v428, 2147483648
        %v435 = vsel %vm433, %v427, %v434
        %vm436 = vcmp.eq.s32.totalorder %v431, 2
        %v437 = vxor.u32 %v427, 2147483648
        %v438 = vsel %vm436, %v437, %v428
        %v439 = vsel %vm432, %v435, %v438
        %v440 = vsel %vm429, nan, %v439
        %v441 = vmul.f32 %v336, %v336
        %v442 = vmul.f32 %v440, %v440
        %v444 = vlaneseq
        %v445 = vshrl.u32 %v444, 7
        %v446 = vsub.s32 0, %v445
        %v447 = vrot.slane %v219, %v446
        %v448 = vlaneseq
        %v449 = vshrl.u32 %v448, 7
        %v450 = vsub.s32 1, %v449
        %v451 = vrot.slane %v219, %v450
        %v454 = vmul.f32 %v441, %v447
        %v455 = vmul.f32 %v442, %v451
        %v456 = vadd.f32 %v215, %v454
        %v457 = vadd.f32 %v216, %v455
        %458 = vst [vmem:[%s211] sm:$0xff] %v456
        %459 = vst [vmem:[%s211 + $0x8] sm:$0xff] %v457
        %s460 = sand.u32 %s107, 1
        %s461 = scalar_lea.sflag [#allocation4], %s460
        %s462 = sand.u32 %s107, 1
        %s463 = smul.addr %s462, 16
        %s464 = scalar_lea.vmem [#allocation7], %s463
        // Predicated region
        $region37: #{tpu_custom_call.1} parent=27 // pred_check
          %p465 = pneg %p117
        $region38: #{tpu_custom_call.1} parent=27 // pred_check_branch
          %467 = sbr.rel (%p465) target = $region40
        $region39: #{tpu_custom_call.1} parent=27 // pred_region
          %s468 = smul.u32 2, %s27
          %s470 = ssub.s32 256, 256
          %471 = vsyncadd %s461, %s470
          %s472 = smul.addr %s26, 2
          %s473 = sadd.s32 %s468, %s472
          %s474 = smul.addr %s25, 2
          %s475 = sadd.s32 %s473, %s474
          %s476 = smul.addr %s475, 128
          %s477 = scalar_lea.hbm %s2, %s476
          %s479 = sshll.u32 %s464, 4
          %s480 = int_to_ptr.vmem [resolvable:$true] %s479
          %482 = dma.vmem_to_hbm [thread:$0]  %s480, 256, %s477, %s461
        $region40: #{tpu_custom_call.1} parent=27 // pred_fallthru
          _
      $region28: #{tpu_custom_call.1} parent=5 // pred_fallthru
        _
      %p483 = scmp.le.s32.totalorder 2, %s15
      // Predicated region
      $region41: #{tpu_custom_call.1} parent=5 // pred_check
        %p484 = pneg %p483
      $region42: #{tpu_custom_call.1} parent=5 // pred_check_branch
        %486 = sbr.rel (%p484) target = $region44
      $region43: #{tpu_custom_call.1} parent=5 // pred_region
        %s487 = ssub.s32 %s15, 2
        // Predicated region
        $region45: #{tpu_custom_call.1} parent=43 // pred_check
          %p488 = pneg %p123
        $region46: #{tpu_custom_call.1} parent=43 // pred_check_branch
          %490 = sbr.rel (%p488) target = $region48
        $region47: #{tpu_custom_call.1} parent=43 // pred_region
          %s491 = sand.u32 %s108, 1
          %s492 = scalar_lea.sflag [#allocation4], %s491
          %s493 = sand.u32 %s108, 1
          %s494 = smul.addr %s493, 16
          %s495 = scalar_lea.vmem [#allocation7], %s494
          %496 = dma.done %s492, 256
        $region48: #{tpu_custom_call.1} parent=43 // pred_fallthru
          _
      $region44: #{tpu_custom_call.1} parent=5 // pred_fallthru
        _
    $region6: #{tpu_custom_call.1} parent=1 // loop_footer
      %s19 = sadd.s32 1, %s15
    $region7: #{tpu_custom_call.1} parent=1 // loop_footer_branch
      %14 = sbr.rel target = $region3
    $region8: #{tpu_custom_call.1} parent=1 // loop_exit
      _
    %497 = vsyncpa [#allocation3], 1
    %s498 = scalar_lea.sflag [#allocation3], 1
    %499 = vsyncpa %s498, 1
    %500 = vsyncpa [#allocation6], 1
    %501 = vsyncpa [#allocation4], 1
    %s502 = scalar_lea.sflag [#allocation4], 1
    %503 = vsyncpa %s502, 1

</llo_original>
